<compile_context>
chip_gen: v7x
topology: tpu7x:2x2x1
jax: 0.10.0
libtpu: 0.0.40
codegen_flags: <defaults>
</compile_context>

<pallas_src>
import functools

import jax
import jax.numpy as jnp
from jax import lax
from jax.experimental import pallas as pl
from jax.experimental.pallas import tpu as pltpu

_LANE = 128
_SUBLANE = 8


def _cdiv(a, b):
    return -(-a // b)


def _mwmse_kernel(pred_ref, label_ref, out_ref, acc_ref, *,
                  tile, rows_valid, n_k, need_mask):
    # pred_ref  : VMEM (1, tile, 128) input dtype
    # label_ref : VMEM (1, tile, 128) input dtype
    # out_ref   : VMEM (1, 1, 1) float32   (resident across the reduction axis)
    # acc_ref   : VMEM (8, 128) float32 scratch accumulator
    #
    # NOTE: all program_id reads happen here, at the top level of the body —
    # never inside a pl.when branch (that was the source of the previous
    # lowering failure).
    if need_mask or n_k > 1:
        k = pl.program_id(1)

    p = pred_ref[0].astype(jnp.float32)       # (tile, 128)
    l = label_ref[0].astype(jnp.float32)
    d = p - l
    sq = d * d                                # (tile, 128)

    if need_mask:
        # Last block may overrun the array: zero out out-of-range rows
        # (contents of those rows are undefined, possibly NaN -> use where).
        rows = k * tile + lax.broadcasted_iota(jnp.int32, (tile, 1), 0)
        sq = jnp.where(rows < rows_valid, sq, jnp.float32(0.0))

    if n_k == 1:
        # Single reduction step: no accumulator needed.
        out_ref[...] = jnp.sum(sq).reshape(1, 1, 1)
    else:
        is_first = k == 0
        is_last = k == n_k - 1

        @pl.when(is_first)
        def _init():
            acc_ref[...] = jnp.zeros((_SUBLANE, _LANE), jnp.float32)

        # Pure-VPU partial reduction into a vreg-shaped accumulator
        # (no per-step cross-lane reduce, no sub-vreg RMW store).
        acc_ref[...] += jnp.sum(
            sq.reshape(tile // _SUBLANE, _SUBLANE, _LANE), axis=0)

        @pl.when(is_last)
        def _finalize():
            out_ref[...] = jnp.sum(acc_ref[...]).reshape(1, 1, 1)


def mask_weighted_mse_tc(pred, label, mask, min_area=1000.0, tile_s=None):
    """pred, label: (B, C, ...); mask: (B, 1, ...). Returns (B,) float32 losses."""
    B, C = pred.shape[0], pred.shape[1]
    label = jnp.reshape(label, pred.shape)     # mirrors label.view(pred.size())

    total = 1
    for d in pred.shape[1:]:
        total *= d

    pred_flat = pred.reshape(B, total)
    label_flat = label.reshape(B, total)

    # Common case (C*H*W % 128 == 0) is copy-free: the reshape below is pure
    # metadata.  Only a non-lane-aligned tail pays a single pad copy (to the
    # next multiple of 128); ragged-in-rows handling is done in-kernel.
    # TODO(synk): remove this remaining pad copy by manually DMA-ing the ragged
    # tail from a pl.ANY HBM ref into a zeroed VMEM scratch.
    if total % _LANE != 0:
        padded = _cdiv(total, _LANE) * _LANE
        pad = padded - total
        pred_flat = jnp.pad(pred_flat, ((0, 0), (0, pad)))
        label_flat = jnp.pad(label_flat, ((0, 0), (0, pad)))
        total = padded

    s_rows = total // _LANE

    # v7x megacore helper: split each batch element's rows 2-ways along the
    # "parallel" axis when cheap to do so (free contiguous reshape); the two
    # partial sums are re-added in the wrapper.  Harmless on v5e/v6e.
    split = 2 if (s_rows % 2 == 0 and s_rows >= 16) else 1
    b_eff = B * split
    rows_eff = s_rows // split

    pred_v = pred_flat.reshape(b_eff, rows_eff, _LANE)
    label_v = label_flat.reshape(b_eff, rows_eff, _LANE)

    # Reduction tile (sublane rows per grid step): ~4 MiB of pred+label per
    # step to amortize the ~0.35 us per-step overhead on all generations.
    itemsize = jnp.dtype(pred.dtype).itemsize
    if tile_s is None:
        tile_cap = 4096 if itemsize >= 4 else 8192
    else:
        tile_cap = max(_SUBLANE, (int(tile_s) // _SUBLANE) * _SUBLANE)

    if rows_eff <= tile_cap:
        tile = rows_eff            # full extent: always a legal block shape
        n_k = 1
        need_mask = False
    else:
        tile = tile_cap            # multiple of 8
        n_k = _cdiv(rows_eff, tile)
        need_mask = (rows_eff % tile) != 0

    # Explicit VMEM budget: 2 inputs x 2 buffers x block + scratch, plus
    # headroom.  Stays within v5e's 16 MiB scoped default and far below v7x's
    # 64 MiB physical VMEM; keep default double buffering (no pl.Buffered).
    block_bytes = tile * _LANE * itemsize
    vmem_needed = 2 * 2 * block_bytes + (_SUBLANE * _LANE * 4) + 4096
    vmem_limit = int(min(max(vmem_needed + (4 << 20), 16 << 20), 56 << 20))

    kernel = functools.partial(
        _mwmse_kernel, tile=tile, rows_valid=rows_eff, n_k=n_k,
        need_mask=need_mask)

    out = pl.pallas_call(
        kernel,
        out_shape=jax.ShapeDtypeStruct((b_eff, 1, 1), jnp.float32),
        grid_spec=pltpu.PrefetchScalarGridSpec(
            num_scalar_prefetch=0,
            grid=(b_eff, n_k),
            in_specs=[
                pl.BlockSpec((1, tile, _LANE), lambda b, k: (b, k, 0)),
                pl.BlockSpec((1, tile, _LANE), lambda b, k: (b, k, 0)),
            ],
            out_specs=pl.BlockSpec((1, 1, 1), lambda b, k: (b, 0, 0)),
            scratch_shapes=[pltpu.VMEM((_SUBLANE, _LANE), jnp.float32)],
        ),
        compiler_params=pltpu.CompilerParams(
            dimension_semantics=("parallel", "arbitrary"),
            vmem_limit_bytes=vmem_limit,
        ),
    )(pred_v, label_v)

    if split > 1:
        sq_sum = out.reshape(B, split).sum(axis=-1)
    else:
        sq_sum = out.reshape(B)

    # Mask reduction + denominator hoisted to the wrapper (mask traffic is
    # ~1/(2C) of pred+label traffic; division here keeps the kernel epilogue
    # trivial and the hot loop scalar-free).
    m_sum = jnp.sum(mask.astype(jnp.float32).reshape(B, -1), axis=-1)
    denom = jnp.float32(C) * jnp.maximum(m_sum, jnp.float32(min_area))
    return sq_sum / denom


def _reference(pred, label, mask, min_area):
    B, C = pred.shape[0], pred.shape[1]
    label = label.reshape(pred.shape)
    sq = jnp.sum(
        (pred.astype(jnp.float32) - label.astype(jnp.float32)) ** 2,
        axis=tuple(range(1, pred.ndim)),
    )
    m_sum = jnp.sum(mask.astype(jnp.float32), axis=tuple(range(1, mask.ndim)))
    return sq / (C * jnp.maximum(m_sum, min_area))


if __name__ == "__main__":
    key = jax.random.PRNGKey(0)

    # Test 1: lane-aligned shapes (copy-free path, single reduction step).
    k1, k2, k3, key = jax.random.split(key, 4)
    B, C, H, W = 2, 4, 16, 16
    pred = jax.random.normal(k1, (B, C, H, W), dtype=jnp.float32)
    label = jax.random.normal(k2, (B, C, H, W), dtype=jnp.float32)
    mask = (jax.random.uniform(k3, (B, 1, H, W)) > 0.5).astype(jnp.float32)

    out = jax.block_until_ready(mask_weighted_mse_tc(pred, label, mask, min_area=1000.0))
    ref = _reference(pred, label, mask, 1000.0)
    assert out.shape == (B,)
    assert jnp.allclose(out, ref, rtol=1e-5, atol=1e-6), (out, ref)

    # Test 2: ragged (non-lane-aligned) shapes and m_sum > min_area.
    k1, k2, k3, key = jax.random.split(key, 4)
    B2, C2, H2, W2 = 3, 3, 10, 10
    pred2 = jax.random.normal(k1, (B2, C2, H2, W2), dtype=jnp.float32)
    label2 = jax.random.normal(k2, (B2, C2, H2, W2), dtype=jnp.float32)
    mask2 = (jax.random.uniform(k3, (B2, 1, H2, W2)) > 0.5).astype(jnp.float32)

    out2 = jax.block_until_ready(
        mask_weighted_mse_tc(pred2, label2, mask2, min_area=10.0))
    ref2 = _reference(pred2, label2, mask2, 10.0)
    assert out2.shape == (B2,)
    assert jnp.allclose(out2, ref2, rtol=1e-5, atol=1e-6), (out2, ref2)

    # Test 3: multi-step reduction with 2-way parallel split and a masked
    # boundary block (rows_eff = 27, tile = 8 -> n_k = 4, last block partial).
    k1, k2, k3, key = jax.random.split(key, 4)
    B3, C3, H3, W3 = 1, 3, 48, 48
    pred3 = jax.random.normal(k1, (B3, C3, H3, W3), dtype=jnp.float32)
    label3 = jax.random.normal(k2, (B3, C3, H3, W3), dtype=jnp.float32)
    mask3 = (jax.random.uniform(k3, (B3, 1, H3, W3)) > 0.5).astype(jnp.float32)

    out3 = jax.block_until_ready(
        mask_weighted_mse_tc(pred3, label3, mask3, min_area=100.0, tile_s=8))
    ref3 = _reference(pred3, label3, mask3, 100.0)
    assert out3.shape == (B3,)
    assert jnp.allclose(out3, ref3, rtol=1e-5, atol=1e-6), (out3, ref3)

    print("KERNEL_OK")
</pallas_src>

<mosaic_0001>
module attributes {stable_mosaic.version = 11 : i64} {
  func.func @_mwmse_kernel(%arg0: i32, %arg1: i32, %arg2: memref<1x8x128xf32, #tpu.memory_space<vmem>>, %arg3: memref<1x8x128xf32, #tpu.memory_space<vmem>>, %arg4: memref<1x1x1xf32, #tpu.memory_space<vmem>>, %arg5: memref<8x128xf32, #tpu.memory_space<vmem>>) attributes {dimension_semantics = [#tpu.dimension_semantics<parallel>, #tpu.dimension_semantics<arbitrary>], iteration_bounds = array<i64: 2, 1>, scalar_prefetch = 0 : i64, scratch_operands = 1 : i64, tpu.core_type = #tpu.core_type<tc>, window_params = [{transform_indices = @transform_0, window_bounds = array<i64: 1, 8, 128>}, {transform_indices = @transform_1, window_bounds = array<i64: 1, 8, 128>}, {transform_indices = @transform_2, window_bounds = array<i64: 1, 1, 1>}]} {
    %c0 = arith.constant 0 : index
    %c0_0 = arith.constant 0 : index
    %c0_1 = arith.constant 0 : index
    %0 = vector.load %arg2[%c0, %c0_0, %c0_1] : memref<1x8x128xf32, #tpu.memory_space<vmem>>, vector<1x8x128xf32>
    %1 = vector.shape_cast %0 : vector<1x8x128xf32> to vector<8x128xf32>
    %c0_2 = arith.constant 0 : index
    %c0_3 = arith.constant 0 : index
    %c0_4 = arith.constant 0 : index
    %2 = vector.load %arg3[%c0_2, %c0_3, %c0_4] : memref<1x8x128xf32, #tpu.memory_space<vmem>>, vector<1x8x128xf32>
    %3 = vector.shape_cast %2 : vector<1x8x128xf32> to vector<8x128xf32>
    %4 = arith.subf %1, %3 : vector<8x128xf32>
    %5 = arith.mulf %4, %4 : vector<8x128xf32>
    %6 = vector.shape_cast %5 : vector<8x128xf32> to vector<1x8x128xf32>
    %cst = arith.constant dense<0.000000e+00> : vector<1xf32>
    %7 = vector.multi_reduction <add>, %6, %cst [1, 2] : vector<1x8x128xf32> to vector<1xf32>
    %8 = vector.shape_cast %7 : vector<1xf32> to vector<1x1x1xf32>
    %9 = vector.extract %8[0, 0, 0] : f32 from vector<1x1x1xf32>
    %10 = vector.broadcast %9 : f32 to vector<1x1x1xf32>
    %c0_5 = arith.constant 0 : index
    %c0_6 = arith.constant 0 : index
    %c0_7 = arith.constant 0 : index
    %11 = vector.load %arg4[%c0_5, %c0_6, %c0_7] : memref<1x1x1xf32, #tpu.memory_space<vmem>>, vector<1x1x1xf32>
    tpu.vector_store %arg4[%c0_5, %c0_6, %c0_7], %10 {strides = array<i32>} : memref<1x1x1xf32, #tpu.memory_space<vmem>>, vector<1x1x1xf32>,
    return
  }
  func.func @transform_0(%arg0: i32, %arg1: i32) -> (i32, i32, i32) {
    %c0_i32 = arith.constant 0 : i32
    %c0_i32_0 = arith.constant 0 : i32
    return %arg0, %arg1, %c0_i32 : i32, i32, i32
  }
  func.func @transform_1(%arg0: i32, %arg1: i32) -> (i32, i32, i32) {
    %c0_i32 = arith.constant 0 : i32
    %c0_i32_0 = arith.constant 0 : i32
    return %arg0, %arg1, %c0_i32 : i32, i32, i32
  }
  func.func @transform_2(%arg0: i32, %arg1: i32) -> (i32, i32, i32) {
    %c0_i32 = arith.constant 0 : i32
    %c0_i32_0 = arith.constant 0 : i32
    %c0_i32_1 = arith.constant 0 : i32
    return %arg0, %c0_i32, %c0_i32_0 : i32, i32, i32
  }
}

</mosaic_0001>

<llo_original>
// kernel: tpu_custom_call.1
$region0: #{tpu_custom_call.1}
  #allocation0 [shape = 'u32[]', space=smem, size = 0x4, offset = 0x4, fixed_abs, tag = 'smem constant byte address 0x4 - core index']
  #allocation1 [shape = 'u32[144,128]{1,0:T(1,128)}', space=vmem, size = 0x12000, scoped, tag = 'internal scratch']
  #allocation2 [shape = 'f32[8,128]{1,0:T(8,128)}', space=vmem, size = 0x1000, scoped, tag = 'scratch operand']
  %s0 = inlined_call_operand.hbm [shape: f32[2,8,128], index: 0, kind: input, shape index: {}]
  %s1 = inlined_call_operand.hbm [shape: f32[2,8,128], index: 1, kind: input, shape index: {}]
  %s2 = inlined_call_operand.vmem [shape: f32[2,1,1], index: 2, kind: output, shape index: {}]
  %s3 = sld [smem:[#allocation0]]
  $region49: #{tpu_custom_call.1} parent=0
    _
  %s5 = ssub.s32 1, %s3
  %s6 = scalar_select 0, %s5, %s3
  $region1: #{tpu_custom_call.1} parent=0
    #allocation3 [shape = 'u8[8192]{0}', space=vmem, size = 0x2000, scoped, tag = 'input window, operand 0']
    #allocation4 [shape = 's32[2]{0}', space=sflag, size = 0x8, scoped, tag = 'scoped memory for tpu_custom_call.1']
    #allocation5 [shape = 'u8[8192]{0}', space=vmem, size = 0x2000, scoped, tag = 'input window, operand 1']
    #allocation6 [shape = 's32[2]{0}', space=sflag, size = 0x8, scoped, tag = 'scoped memory for tpu_custom_call.1']
    %7 = vsyncpa [#allocation4], 0
    %s8 = scalar_lea.sflag [#allocation4], 1
    %9 = vsyncpa %s8, 0
    %10 = vsyncpa [#allocation6], 0
    %s11 = scalar_lea.sflag [#allocation6], 1
    %12 = vsyncpa %s11, 0
    loop: start=0, step=1, limit=4
    $region2: #{tpu_custom_call.1} parent=1 // loop_pre_header
      _
    $region3: #{tpu_custom_call.1} parent=1 // loop_header
      %s14 = sphi 0, %s18
      %p15 = scmp.ge.s32.totalorder %s14, 4
      %s21 = sphi 0, %s33
      %s22 = sphi 0, %s29
      %s23 = sphi 0, %s21
      %s24 = sphi 0, %s22
      %s25 = sphi 0, %s23
      %s26 = sphi 0, %s24
      %s38 = sphi 0, %s40
      %s41 = sphi 0, %s38
      %s42 = sphi 0, %s41
      %s58 = sphi 0, %s42
      %s66 = sphi 0, %s68
      %s69 = sphi 0, %s66
      %s70 = sphi 0, %s69
      %s86 = sphi 0, %s70
      %s92 = sphi 0, %s94
      %s95 = sphi 0, %s92
      %s96 = sphi 0, %s95
      %s112 = sphi 0, %s96
    $region4: #{tpu_custom_call.1} parent=1 // loop_header_branch
      %17 = sbr.rel (%p15) target = $region8
    $region5: #{tpu_custom_call.1} parent=1 // loop_body
      %s19 = ssub.s32 %s14, 1
      %s20 = ssub.s32 %s14, 2
      %s27 = sadd.s32 1, %s22
      %p28 = scmp.ge.s32.totalorder %s27, 1
      %s29 = scalar_select %p28, 0, %s27
      %s30 = sadd.s32 1, %s21
      %s31 = scalar_select %p28, %s30, %s21
      %p32 = scmp.ge.s32.totalorder %s31, 2
      %s33 = scalar_select %p32, 0, %s31
      %s34 = ssub.s32 %s21, %s33
      %s35 = ssub.s32 %s22, %s29
      %s36 = sor.u32 %s34, %s35
      %p37 = scmp.eq.s32.totalorder %s36, 0
      %s39 = sadd.s32 %s38, 1
      %s40 = scalar_select %p37, %s38, %s39
      %p43 = pneg %p37
      %p44 = scmp.eq.s32.totalorder %s14, 1
      %p45 = por %p43, %p44
      %p46 = scmp.ne.s32.totalorder %s38, %s41
      %p47 = scmp.eq.s32.totalorder %s14, 0
      %p48 = por %p46, %p47
      %p49 = scmp.ne.s32.totalorder %s38, %s41
      %p50 = scmp.eq.s32.totalorder %s19, 1
      %p51 = por %p49, %p50
      %p52 = scmp.ne.s32.totalorder %s41, %s42
      %p53 = scmp.eq.s32.totalorder %s19, 0
      %p54 = por %p52, %p53
      %p55 = scmp.ne.s32.totalorder %s41, %s42
      %p56 = scmp.eq.s32.totalorder %s20, 1
      %p57 = por %p55, %p56
      %p59 = scmp.ne.s32.totalorder %s42, %s58
      %p60 = scmp.eq.s32.totalorder %s20, 0
      %p61 = por %p59, %p60
      %s62 = ssub.s32 %s21, %s33
      %s63 = ssub.s32 %s22, %s29
      %s64 = sor.u32 %s62, %s63
      %p65 = scmp.eq.s32.totalorder %s64, 0
      %s67 = sadd.s32 %s66, 1
      %s68 = scalar_select %p65, %s66, %s67
      %p71 = pneg %p65
      %p72 = scmp.eq.s32.totalorder %s14, 1
      %p73 = por %p71, %p72
      %p74 = scmp.ne.s32.totalorder %s66, %s69
      %p75 = scmp.eq.s32.totalorder %s14, 0
      %p76 = por %p74, %p75
      %p77 = scmp.ne.s32.totalorder %s66, %s69
      %p78 = scmp.eq.s32.totalorder %s19, 1
      %p79 = por %p77, %p78
      %p80 = scmp.ne.s32.totalorder %s69, %s70
      %p81 = scmp.eq.s32.totalorder %s19, 0
      %p82 = por %p80, %p81
      %p83 = scmp.ne.s32.totalorder %s69, %s70
      %p84 = scmp.eq.s32.totalorder %s20, 1
      %p85 = por %p83, %p84
      %p87 = scmp.ne.s32.totalorder %s70, %s86
      %p88 = scmp.eq.s32.totalorder %s20, 0
      %p89 = por %p87, %p88
      %s90 = ssub.s32 %s21, %s33
      %p91 = scmp.eq.s32.totalorder %s90, 0
      %s93 = sadd.s32 %s92, 1
      %s94 = scalar_select %p91, %s92, %s93
      %p97 = pneg %p91
      %p98 = scmp.eq.s32.totalorder %s14, 1
      %p99 = por %p97, %p98
      %p100 = scmp.ne.s32.totalorder %s92, %s95
      %p101 = scmp.eq.s32.totalorder %s14, 0
      %p102 = por %p100, %p101
      %p103 = scmp.ne.s32.totalorder %s92, %s95
      %p104 = scmp.eq.s32.totalorder %s19, 1
      %p105 = por %p103, %p104
      %p106 = scmp.ne.s32.totalorder %s95, %s96
      %p107 = scmp.eq.s32.totalorder %s19, 0
      %p108 = por %p106, %p107
      %p109 = scmp.ne.s32.totalorder %s95, %s96
      %p110 = scmp.eq.s32.totalorder %s20, 1
      %p111 = por %p109, %p110
      %p113 = scmp.ne.s32.totalorder %s96, %s112
      %p114 = scmp.eq.s32.totalorder %s20, 0
      %p115 = por %p113, %p114
      %p116 = scmp.le.s32.totalorder 1, %s14
      %p117 = scmp.lt.s32.totalorder %s14, 3
      %p118 = pnand %p116, %p117
      %p119 = pneg %p118
      // Predicated region
      $region9: #{tpu_custom_call.1} parent=5 // pred_check
        _
      $region10: #{tpu_custom_call.1} parent=5 // pred_check_branch
        %121 = sbr.rel (%p118) target = $region12
      $region11: #{tpu_custom_call.1} parent=5 // pred_region
        %s122 = ssub.s32 %s14, 1
      $region12: #{tpu_custom_call.1} parent=5 // pred_fallthru
        _
      %p123 = scmp.lt.s32.totalorder %s14, 2
      // Predicated region
      $region13: #{tpu_custom_call.1} parent=5 // pred_check
        %p124 = pneg %p123
      $region14: #{tpu_custom_call.1} parent=5 // pred_check_branch
        %126 = sbr.rel (%p124) target = $region16
      $region15: #{tpu_custom_call.1} parent=5 // pred_region
        // Predicated region
        $region17: #{tpu_custom_call.1} parent=15 // pred_check
          %p127 = pneg %p48
        $region18: #{tpu_custom_call.1} parent=15 // pred_check_branch
          %129 = sbr.rel (%p127) target = $region20
        $region19: #{tpu_custom_call.1} parent=15 // pred_region
          %s130 = sand.u32 %s38, 1
          %s131 = scalar_lea.sflag [#allocation4], %s130
          %s132 = sand.u32 %s38, 1
          %s133 = smul.addr %s132, 8
          %s134 = scalar_lea.vmem [#allocation3], %s133
          %s136 = ssub.s32 128, 128
          %137 = vsyncadd %s131, %s136
          %s138 = sadd.s32 %s22, %s21
          %s139 = smul.addr %s138, 128
          %s140 = scalar_lea.hbm %s0, %s139
          %s142 = sshll.u32 %s134, 4
          %s143 = int_to_ptr.vmem [resolvable:$true] %s142
          %145 = dma.hbm_to_vmem [thread:$0]  %s140, 128, %s143, %s131
        $region20: #{tpu_custom_call.1} parent=15 // pred_fallthru
          _
        // Predicated region
        $region21: #{tpu_custom_call.1} parent=15 // pred_check
          %p146 = pneg %p76
        $region22: #{tpu_custom_call.1} parent=15 // pred_check_branch
          %148 = sbr.rel (%p146) target = $region24
        $region23: #{tpu_custom_call.1} parent=15 // pred_region
          %s149 = sand.u32 %s66, 1
          %s150 = scalar_lea.sflag [#allocation6], %s149
          %s151 = sand.u32 %s66, 1
          %s152 = smul.addr %s151, 8
          %s153 = scalar_lea.vmem [#allocation5], %s152
          %s155 = ssub.s32 128, 128
          %156 = vsyncadd %s150, %s155
          %s157 = sadd.s32 %s22, %s21
          %s158 = smul.addr %s157, 128
          %s159 = scalar_lea.hbm %s1, %s158
          %s161 = sshll.u32 %s153, 4
          %s162 = int_to_ptr.vmem [resolvable:$true] %s161
          %164 = dma.hbm_to_vmem [thread:$0]  %s159, 128, %s162, %s150
        $region24: #{tpu_custom_call.1} parent=15 // pred_fallthru
          _
      $region16: #{tpu_custom_call.1} parent=5 // pred_fallthru
        _
      %p165 = scmp.le.s32.totalorder 1, %s14
      %p166 = scmp.lt.s32.totalorder %s14, 3
      %p167 = pnand %p165, %p166
      %p168 = pneg %p167
      // Predicated region
      $region25: #{tpu_custom_call.1} parent=5 // pred_check
        _
      $region26: #{tpu_custom_call.1} parent=5 // pred_check_branch
        %170 = sbr.rel (%p167) target = $region28
      $region27: #{tpu_custom_call.1} parent=5 // pred_region
        %s171 = ssub.s32 %s14, 1
        %s172 = sand.u32 %s41, 1
        %s173 = scalar_lea.sflag [#allocation4], %s172
        %s174 = sand.u32 %s41, 1
        %s175 = smul.addr %s174, 8
        %s176 = scalar_lea.vmem [#allocation3], %s175
        // Predicated region
        $region29: #{tpu_custom_call.1} parent=27 // pred_check
          %p177 = pneg %p54
        $region30: #{tpu_custom_call.1} parent=27 // pred_check_branch
          %179 = sbr.rel (%p177) target = $region32
        $region31: #{tpu_custom_call.1} parent=27 // pred_region
          %180 = dma.done %s173, 128
        $region32: #{tpu_custom_call.1} parent=27 // pred_fallthru
          _
        %s181 = sand.u32 %s69, 1
        %s182 = scalar_lea.sflag [#allocation6], %s181
        %s183 = sand.u32 %s69, 1
        %s184 = smul.addr %s183, 8
        %s185 = scalar_lea.vmem [#allocation5], %s184
        // Predicated region
        $region33: #{tpu_custom_call.1} parent=27 // pred_check
          %p186 = pneg %p82
        $region34: #{tpu_custom_call.1} parent=27 // pred_check_branch
          %188 = sbr.rel (%p186) target = $region36
        $region35: #{tpu_custom_call.1} parent=27 // pred_region
          %189 = dma.done %s182, 128
        $region36: #{tpu_custom_call.1} parent=27 // pred_fallthru
          _
        %s190 = sand.u32 %s41, 1
        %s191 = scalar_lea.sflag [#allocation4], %s190
        %s192 = sand.u32 %s41, 1
        %s193 = smul.addr %s192, 8
        %s194 = scalar_lea.vmem [#allocation3], %s193
        %p195 = pneg %p54
        %p196 = pneg %p51
        %s197 = sand.u32 %s69, 1
        %s198 = scalar_lea.sflag [#allocation6], %s197
        %s199 = sand.u32 %s69, 1
        %s200 = smul.addr %s199, 8
        %s201 = scalar_lea.vmem [#allocation5], %s200
        %p202 = pneg %p82
        %p203 = pneg %p79
        %p204 = pneg %p108
        %p205 = pneg %p105
        %p206 = scmp.lt.s32.totalorder %s23, 1
        %s207 = scalar_select %p206, %s23, 1
        %s208 = scalar_lea.vmem %s2, %s207
        %p209 = scmp.lt.s32.totalorder %s23, 1
        %s210 = scalar_select %p209, %s23, 1
        %s211 = scalar_lea.vmem %s2, %s210
        %v212 = vld [vmem:[%s176] sm:$0xff]
        %v213 = vld [vmem:[%s185] sm:$0xff]
        %v214 = vsub.f32 %v212, %v213
        %v215 = vmul.f32 %v214, %v214
        %216 = vadd.xlane.f32.xlu0 %v215
        %v217 = vpop.xlane.xlu0 %216
        %v218 = vrot.slane %v217, 4
        %v219 = vadd.f32 %v217, %v218
        %v220 = vrot.slane %v219, 2
        %v221 = vadd.f32 %v219, %v220
        %v222 = vrot.slane %v221, 1
        %v223 = vadd.f32 %v221, %v222
        %s224 = vtos %v223
        %v225 = vstv %s224
        %vm226 = vcmask 0
        %227 = vst.msk [vmem:[%s211] sm:$0x1] %vm226, %v225
        %p228 = scmp.lt.s32.totalorder %s23, 1
        %s229 = scalar_select %p228, %s23, 1
        %s230 = scalar_lea.vmem %s2, %s229
        // Predicated region
        $region37: #{tpu_custom_call.1} parent=27 // pred_check
          %p231 = pneg %p105
        $region38: #{tpu_custom_call.1} parent=27 // pred_check_branch
          %233 = sbr.rel (%p231) target = $region40
        $region39: #{tpu_custom_call.1} parent=27 // pred_region
          _
        $region40: #{tpu_custom_call.1} parent=27 // pred_fallthru
          _
      $region28: #{tpu_custom_call.1} parent=5 // pred_fallthru
        _
      %p234 = scmp.le.s32.totalorder 2, %s14
      // Predicated region
      $region41: #{tpu_custom_call.1} parent=5 // pred_check
        %p235 = pneg %p234
      $region42: #{tpu_custom_call.1} parent=5 // pred_check_branch
        %237 = sbr.rel (%p235) target = $region44
      $region43: #{tpu_custom_call.1} parent=5 // pred_region
        %s238 = ssub.s32 %s14, 2
        // Predicated region
        $region45: #{tpu_custom_call.1} parent=43 // pred_check
          %p239 = pneg %p111
        $region46: #{tpu_custom_call.1} parent=43 // pred_check_branch
          %241 = sbr.rel (%p239) target = $region48
        $region47: #{tpu_custom_call.1} parent=43 // pred_region
          %p242 = scmp.lt.s32.totalorder %s25, 1
          %s243 = scalar_select %p242, %s25, 1
          %s244 = scalar_lea.vmem %s2, %s243
        $region48: #{tpu_custom_call.1} parent=43 // pred_fallthru
          _
      $region44: #{tpu_custom_call.1} parent=5 // pred_fallthru
        _
    $region6: #{tpu_custom_call.1} parent=1 // loop_footer
      %s18 = sadd.s32 1, %s14
    $region7: #{tpu_custom_call.1} parent=1 // loop_footer_branch
      %13 = sbr.rel target = $region3
    $region8: #{tpu_custom_call.1} parent=1 // loop_exit
      _
    %245 = vsyncpa [#allocation4], 1
    %s246 = scalar_lea.sflag [#allocation4], 1
    %247 = vsyncpa %s246, 1
    %248 = vsyncpa [#allocation6], 1
    %s249 = scalar_lea.sflag [#allocation6], 1
    %250 = vsyncpa %s249, 1

</llo_original>
